<compile_context>
chip_gen: v7x
topology: tpu7x:2x2x1
jax: 0.10.0
libtpu: 0.0.40
codegen_flags: <defaults>
</compile_context>

<pallas_src>
import jax
import jax.numpy as jnp
from jax.experimental import pallas as pl
from jax.experimental.pallas import tpu as pltpu


NEG_SLOPE = 0.01


def _round_up(x, m):
    return ((x + m - 1) // m) * m


def _cdiv(a, b):
    return -(-a // b)


def _leaky_relu(x, slope=NEG_SLOPE):
    # Exact for 0 < slope < 1: max(x, slope*x) == leaky_relu(x).
    return jnp.maximum(x, slope * x)


# ---------------------------------------------------------------------------
# Kernel
# ---------------------------------------------------------------------------
def _make_actor_kernel(S, LANES, offs, compute_dtype):
    """Build the kernel with static (Python-int) slab offsets baked in."""
    r_w1, r_w2, r_wha, r_whs, r_b1, r_b2, r_bh = offs

    def kernel(state_ref, w_ref, out_ref):
        state = state_ref[...].astype(compute_dtype)              # [TB, S]

        # Static, sublane-aligned slices of the packed weight slab.
        w1  = w_ref[r_w1:r_w1 + S, :]                             # [S, LANES]
        w2  = w_ref[r_w2:r_w2 + LANES, :]                         # [LANES, LANES]
        wha = w_ref[r_wha:r_wha + LANES, :]                       # [LANES, LANES] (h2 -> heads)
        whs = w_ref[r_whs:r_whs + S, :]                           # [S, LANES]     (passthrough)
        b1  = w_ref[r_b1:r_b1 + 1, :].astype(jnp.float32)         # [1, LANES]
        b2  = w_ref[r_b2:r_b2 + 1, :].astype(jnp.float32)         # [1, LANES]
        bh  = w_ref[r_bh:r_bh + 1, :].astype(jnp.float32)         # [1, LANES]

        # Hidden layer 1 + leaky_relu (padded lanes stay exactly zero).
        h = jnp.dot(state, w1, preferred_element_type=jnp.float32) + b1
        h = _leaky_relu(h).astype(compute_dtype)                  # [TB, LANES]

        # Hidden layer 2 + leaky_relu.
        h = jnp.dot(h, w2, preferred_element_type=jnp.float32) + b2
        h = _leaky_relu(h).astype(compute_dtype)                  # [TB, LANES]

        # Heads as two K-aligned dots summed (no lane-axis concat):
        #   [actions | action_params] = h @ [Wa|Wp]  +  state @ [0|Wpt]  +  [ba | bp+bpt]
        out = (jnp.dot(h, wha, preferred_element_type=jnp.float32)
               + jnp.dot(state, whs, preferred_element_type=jnp.float32)
               + bh)

        out_ref[...] = out.astype(out_ref.dtype)                  # lane-dense store

    return kernel


# ---------------------------------------------------------------------------
# Wrapper-side packing
# ---------------------------------------------------------------------------
def pack_actor_params(params, state_size, *, use_bf16=False):
    """Pack all weights/biases into one lane-padded slab.

    Row layout (each block's start offset rounded up to a multiple of 8):
        [r_w1  : r_w1 +S    , :]  W1  (padded to LANES cols)
        [r_w2  : r_w2 +LANES, :]  W2
        [r_wha : r_wha+LANES, :]  [Wa | Wp]   (h2 -> head lanes)
        [r_whs : r_whs+S    , :]  [0  | Wpt]  (state passthrough -> head lanes)
        [r_b1]                    b1
        [r_b2]                    b2
        [r_bh]                    [ba | bp+bpt]
    """
    S = state_size
    h1 = params["w1"].shape[1]
    h2 = params["w2"].shape[1]
    A = params["wa"].shape[1]
    P = params["wp"].shape[1]
    LANES = max(_round_up(h1, 128), _round_up(h2, 128), _round_up(A + P, 128))

    r_w1 = 0
    r_w2 = _round_up(r_w1 + S, 8)
    r_wha = _round_up(r_w2 + LANES, 8)
    r_whs = _round_up(r_wha + LANES, 8)
    r_b1 = _round_up(r_whs + S, 8)
    r_b2 = r_b1 + 8
    r_bh = r_b2 + 8
    R = r_bh + 8

    slab = jnp.zeros((R, LANES), jnp.float32)
    slab = slab.at[r_w1:r_w1 + S, :h1].set(params["w1"])
    slab = slab.at[r_w2:r_w2 + h1, :h2].set(params["w2"])
    # head block (from h2)
    slab = slab.at[r_wha:r_wha + h2, :A].set(params["wa"])
    slab = slab.at[r_wha:r_wha + h2, A:A + P].set(params["wp"])
    # passthrough block (from state)
    slab = slab.at[r_whs:r_whs + S, A:A + P].set(params["wpt"])
    # biases
    slab = slab.at[r_b1, :h1].set(params["b1"].reshape(-1))
    slab = slab.at[r_b2, :h2].set(params["b2"].reshape(-1))
    slab = slab.at[r_bh, :A].set(params["ba"].reshape(-1))
    slab = slab.at[r_bh, A:A + P].set(params["bp"].reshape(-1)
                                      + params["bpt"].reshape(-1))

    if use_bf16:
        slab = slab.astype(jnp.bfloat16)

    offs = (r_w1, r_w2, r_wha, r_whs, r_b1, r_b2, r_bh)
    return slab, offs, LANES, A, P


def _choose_tile(B, block_b):
    """Pick batch tile so large batches get big tiles but the grid keeps
    >= 2 steps when possible (lets v7x shard the 'parallel' axis over 2 TCs)."""
    n_tiles = max(1, _cdiv(B, block_b))
    if B > 16:                       # enough rows to justify two tiles
        n_tiles = max(n_tiles, 2)
    TB = _round_up(_cdiv(B, n_tiles), 8)
    Bp = _round_up(B, TB)
    return TB, Bp


# ---------------------------------------------------------------------------
# Forward
# ---------------------------------------------------------------------------
def actor_forward(state, params, *, block_b=2048, use_bf16=False,
                  return_packed=False):
    """Pallas forward: 1 weight DMA, batch tiled over a parallel grid."""
    B, S = state.shape
    slab, offs, LANES, A, P = pack_actor_params(params, S, use_bf16=use_bf16)

    TB, Bp = _choose_tile(B, block_b)
    if Bp != B:
        state = jnp.pad(state, ((0, Bp - B), (0, 0)))

    compute_dtype = jnp.bfloat16 if use_bf16 else jnp.float32
    kernel = _make_actor_kernel(S, LANES, offs, compute_dtype)

    flops = 2 * Bp * (S * LANES + LANES * LANES + LANES * LANES + S * LANES)
    bytes_accessed = (4 * Bp * S + slab.size * slab.dtype.itemsize
                      + 4 * Bp * LANES)

    # Double-buffered state + out tiles, double-buffered slab, plus headroom.
    vmem_need = (4 * (2 * TB * S + 2 * TB * LANES)
                 + 2 * slab.size * slab.dtype.itemsize + (2 << 20))
    vmem_limit = int(min(max(vmem_need, 32 << 20), 64 << 20))

    out = pl.pallas_call(
        kernel,
        out_shape=jax.ShapeDtypeStruct((Bp, LANES), jnp.float32),
        grid_spec=pltpu.PrefetchScalarGridSpec(
            num_scalar_prefetch=0,
            grid=(Bp // TB,),
            in_specs=[
                pl.BlockSpec((TB, S), lambda i: (i, 0)),          # state tile
                pl.BlockSpec(slab.shape, lambda i: (0, 0)),       # resident weights
            ],
            out_specs=pl.BlockSpec((TB, LANES), lambda i: (i, 0)),
        ),
        compiler_params=pltpu.CompilerParams(
            dimension_semantics=("parallel",),
            vmem_limit_bytes=vmem_limit),
        cost_estimate=pl.CostEstimate(flops=flops, transcendentals=0,
                                      bytes_accessed=bytes_accessed),
    )(state, slab)

    if return_packed:
        # Lane-dense slab: actions = out[:, :A], action_params = out[:, A:A+P].
        return out[:B], A, P

    actions = out[:B, :A]
    action_params = out[:B, A:A + P]
    return actions, action_params


# ---------------------------------------------------------------------------
# Init (mirrors Actor.__init__: normal(std=init_std) weights, zero biases,
# passthrough layer zero + frozen) and pure-JAX reference.
# ---------------------------------------------------------------------------
def init_actor_params(key, state_size, hidden_layers, action_size,
                      action_parameter_size, init_std=0.01):
    k1, k2, ka, kp = jax.random.split(key, 4)
    h1, h2 = hidden_layers
    return {
        "w1": init_std * jax.random.normal(k1, (state_size, h1), jnp.float32),
        "b1": jnp.zeros((1, h1), jnp.float32),
        "w2": init_std * jax.random.normal(k2, (h1, h2), jnp.float32),
        "b2": jnp.zeros((1, h2), jnp.float32),
        "wa": init_std * jax.random.normal(ka, (h2, action_size), jnp.float32),
        "ba": jnp.zeros((1, action_size), jnp.float32),
        "wp": init_std * jax.random.normal(kp, (h2, action_parameter_size), jnp.float32),
        "bp": jnp.zeros((1, action_parameter_size), jnp.float32),
        # passthrough layer: zero weight, zero bias, frozen (kept for fidelity)
        "wpt": jnp.zeros((state_size, action_parameter_size), jnp.float32),
        "bpt": jnp.zeros((1, action_parameter_size), jnp.float32),
    }


def actor_reference(state, p):
    def lrelu(x):
        return jnp.where(x > 0, x, NEG_SLOPE * x)
    x = lrelu(state @ p["w1"] + p["b1"])
    x = lrelu(x @ p["w2"] + p["b2"])
    actions = x @ p["wa"] + p["ba"]
    action_params = x @ p["wp"] + p["bp"] + (state @ p["wpt"] + p["bpt"])
    return actions, action_params


if __name__ == "__main__":
    # Small shapes consistent with the module's forward.
    state_size = 16
    hidden_layers = (32, 32)
    action_size = 4
    action_parameter_size = 6

    key = jax.random.PRNGKey(0)
    k_state, k_state2, k_params = jax.random.split(key, 3)

    params = init_actor_params(k_params, state_size, hidden_layers,
                               action_size, action_parameter_size)

    # --- single-tile path (batch=8) ---
    batch = 8
    state = jax.random.normal(k_state, (batch, state_size), jnp.float32)
    actions, action_params = actor_forward(state, params)
    actions = jax.block_until_ready(actions)
    action_params = jax.block_until_ready(action_params)

    ref_actions, ref_params = actor_reference(state, params)
    assert actions.shape == (batch, action_size)
    assert action_params.shape == (batch, action_parameter_size)
    assert jnp.allclose(actions, ref_actions, atol=1e-5, rtol=1e-5)
    assert jnp.allclose(action_params, ref_params, atol=1e-5, rtol=1e-5)

    # --- multi-tile path with batch padding (batch=40 -> 2 tiles of 24) ---
    batch2 = 40
    state2 = jax.random.normal(k_state2, (batch2, state_size), jnp.float32)
    actions2, action_params2 = actor_forward(state2, params)
    actions2 = jax.block_until_ready(actions2)
    action_params2 = jax.block_until_ready(action_params2)

    ref_actions2, ref_params2 = actor_reference(state2, params)
    assert actions2.shape == (batch2, action_size)
    assert action_params2.shape == (batch2, action_parameter_size)
    assert jnp.allclose(actions2, ref_actions2, atol=1e-5, rtol=1e-5)
    assert jnp.allclose(action_params2, ref_params2, atol=1e-5, rtol=1e-5)

    print("KERNEL_OK")
</pallas_src>

<mosaic_0001>
module attributes {stable_mosaic.version = 11 : i64} {
  func.func @kernel(%arg0: i32, %arg1: memref<8x16xf32, #tpu.memory_space<vmem>>, %arg2: memref<312x128xf32, #tpu.memory_space<vmem>>, %arg3: memref<8x128xf32, #tpu.memory_space<vmem>>) attributes {dimension_semantics = [#tpu.dimension_semantics<parallel>], iteration_bounds = array<i64: 1>, scalar_prefetch = 0 : i64, scratch_operands = 0 : i64, tpu.core_type = #tpu.core_type<tc>, window_params = [{transform_indices = @transform_0, window_bounds = array<i64: 8, 16>}, {pipeline_mode = #tpu.pipeline_mode<synchronous>, transform_indices = @transform_1, window_bounds = array<i64: 312, 128>}, {transform_indices = @transform_2, window_bounds = array<i64: 8, 128>}]} {
    %c0 = arith.constant 0 : index
    %c0_0 = arith.constant 0 : index
    %0 = vector.load %arg1[%c0, %c0_0] : memref<8x16xf32, #tpu.memory_space<vmem>>, vector<8x16xf32>
    %c0_1 = arith.constant 0 : index
    %c0_2 = arith.constant 0 : index
    %1 = vector.load %arg2[%c0_1, %c0_2] : memref<312x128xf32, #tpu.memory_space<vmem>>, vector<16x128xf32>
    %c16 = arith.constant 16 : index
    %c0_3 = arith.constant 0 : index
    %2 = vector.load %arg2[%c16, %c0_3] : memref<312x128xf32, #tpu.memory_space<vmem>>, vector<128x128xf32>
    %c144 = arith.constant 144 : index
    %c0_4 = arith.constant 0 : index
    %3 = vector.load %arg2[%c144, %c0_4] : memref<312x128xf32, #tpu.memory_space<vmem>>, vector<128x128xf32>
    %c272 = arith.constant 272 : index
    %c0_5 = arith.constant 0 : index
    %4 = vector.load %arg2[%c272, %c0_5] : memref<312x128xf32, #tpu.memory_space<vmem>>, vector<16x128xf32>
    %c288 = arith.constant 288 : index
    %c0_6 = arith.constant 0 : index
    %5 = vector.load %arg2[%c288, %c0_6] : memref<312x128xf32, #tpu.memory_space<vmem>>, vector<1x128xf32>
    %c296 = arith.constant 296 : index
    %c0_7 = arith.constant 0 : index
    %6 = vector.load %arg2[%c296, %c0_7] : memref<312x128xf32, #tpu.memory_space<vmem>>, vector<1x128xf32>
    %c304 = arith.constant 304 : index
    %c0_8 = arith.constant 0 : index
    %7 = vector.load %arg2[%c304, %c0_8] : memref<312x128xf32, #tpu.memory_space<vmem>>, vector<1x128xf32>
    %cst = arith.constant dense<0.000000e+00> : vector<8x128xf32>
    %8 = tpu.matmul %0, %1, %cst {dimension_numbers = #tpu.dot_dimension_numbers<[1], [0], [0], [1], [0, 0, 1, 1], [], []>} : vector<8x16xf32>, vector<16x128xf32>, vector<8x128xf32> -> vector<8x128xf32>
    %9 = vector.broadcast %5 : vector<1x128xf32> to vector<8x128xf32>
    %10 = arith.addf %8, %9 : vector<8x128xf32>
    %cst_9 = arith.constant 0.00999999977 : f32
    %11 = vector.broadcast %cst_9 : f32 to vector<8x128xf32>
    %12 = arith.mulf %11, %10 : vector<8x128xf32>
    %13 = arith.maximumf %10, %12 : vector<8x128xf32>
    %cst_10 = arith.constant dense<0.000000e+00> : vector<8x128xf32>
    %14 = tpu.matmul %13, %2, %cst_10 {dimension_numbers = #tpu.dot_dimension_numbers<[1], [0], [0], [1], [0, 0, 1, 1], [], []>} : vector<8x128xf32>, vector<128x128xf32>, vector<8x128xf32> -> vector<8x128xf32>
    %15 = vector.broadcast %6 : vector<1x128xf32> to vector<8x128xf32>
    %16 = arith.addf %14, %15 : vector<8x128xf32>
    %cst_11 = arith.constant 0.00999999977 : f32
    %17 = vector.broadcast %cst_11 : f32 to vector<8x128xf32>
    %18 = arith.mulf %17, %16 : vector<8x128xf32>
    %19 = arith.maximumf %16, %18 : vector<8x128xf32>
    %cst_12 = arith.constant dense<0.000000e+00> : vector<8x128xf32>
    %20 = tpu.matmul %19, %3, %cst_12 {dimension_numbers = #tpu.dot_dimension_numbers<[1], [0], [0], [1], [0, 0, 1, 1], [], []>} : vector<8x128xf32>, vector<128x128xf32>, vector<8x128xf32> -> vector<8x128xf32>
    %cst_13 = arith.constant dense<0.000000e+00> : vector<8x128xf32>
    %21 = tpu.matmul %0, %4, %cst_13 {dimension_numbers = #tpu.dot_dimension_numbers<[1], [0], [0], [1], [0, 0, 1, 1], [], []>} : vector<8x16xf32>, vector<16x128xf32>, vector<8x128xf32> -> vector<8x128xf32>
    %22 = arith.addf %20, %21 : vector<8x128xf32>
    %23 = vector.broadcast %7 : vector<1x128xf32> to vector<8x128xf32>
    %24 = arith.addf %22, %23 : vector<8x128xf32>
    %c0_14 = arith.constant 0 : index
    %c0_15 = arith.constant 0 : index
    %25 = vector.load %arg3[%c0_14, %c0_15] : memref<8x128xf32, #tpu.memory_space<vmem>>, vector<8x128xf32>
    tpu.vector_store %arg3[%c0_14, %c0_15], %24 {strides = array<i32>} : memref<8x128xf32, #tpu.memory_space<vmem>>, vector<8x128xf32>,
    return
  }
  func.func @transform_0(%arg0: i32) -> (i32, i32) {
    %c0_i32 = arith.constant 0 : i32
    %c0_i32_0 = arith.constant 0 : i32
    return %arg0, %c0_i32 : i32, i32
  }
  func.func @transform_1(%arg0: i32) -> (i32, i32) {
    %c0_i32 = arith.constant 0 : i32
    %c0_i32_0 = arith.constant 0 : i32
    %c0_i32_1 = arith.constant 0 : i32
    return %c0_i32, %c0_i32_0 : i32, i32
  }
  func.func @transform_2(%arg0: i32) -> (i32, i32) {
    %c0_i32 = arith.constant 0 : i32
    %c0_i32_0 = arith.constant 0 : i32
    return %arg0, %c0_i32 : i32, i32
  }
}

</mosaic_0001>

<llo_original>
// kernel: tpu_custom_call.1
$region0: #{tpu_custom_call.1}
  #allocation0 [shape = 'u32[]', space=smem, size = 0x4, offset = 0x4, fixed_abs, tag = 'smem constant byte address 0x4 - core index']
  #allocation1 [shape = 'u32[144,128]{1,0:T(1,128)}', space=vmem, size = 0x12000, scoped, tag = 'internal scratch']
  %s0 = inlined_call_operand.hbm [shape: f32[8,16], index: 0, kind: input, shape index: {}]
  %s1 = inlined_call_operand.hbm [shape: f32[312,128], index: 1, kind: input, shape index: {}]
  %s2 = inlined_call_operand.hbm [shape: f32[8,128], index: 2, kind: output, shape index: {}]
  %s3 = sld [smem:[#allocation0]]
  $region26: #{tpu_custom_call.1} parent=0
    _
  %s5 = ssub.s32 1, %s3
  %s6 = scalar_select 0, %s5, %s3
  $region1: #{tpu_custom_call.1} parent=0
    #allocation2 [shape = 'u8[4096]{0}', space=vmem, size = 0x1000, scoped, tag = 'input window, operand 0, single buffered']
    #allocation3 [shape = 's32[1]{0}', space=sflag, size = 0x4, scoped, tag = 'scoped memory for tpu_custom_call.1']
    #allocation4 [shape = 's32[1]{0}', space=sflag, size = 0x4, scoped, tag = 'scoped memory for tpu_custom_call.1']
    #allocation5 [shape = 'u8[159744]{0}', space=vmem, size = 0x27000, scoped, tag = 'input window, operand 1, single buffered']
    #allocation6 [shape = 's32[1]{0}', space=sflag, size = 0x4, scoped, tag = 'scoped memory for tpu_custom_call.1']
    #allocation7 [shape = 'u8[4096]{0}', space=vmem, size = 0x1000, scoped, tag = 'output window, operand 0, single buffered']
    %7 = vsyncpa [#allocation3], 0
    %8 = vsyncpa [#allocation6], 0
    %9 = vsyncpa [#allocation4], 0
    // Predicated region
    $region2: #{tpu_custom_call.1} parent=1 // pred_check
      _
    $region3: #{tpu_custom_call.1} parent=1 // pred_check_branch
      %11 = sbr.rel (0) target = $region5
    $region4: #{tpu_custom_call.1} parent=1 // pred_region
      %s13 = ssub.s32 128, 128
      %14 = vsyncadd [#allocation3], %s13
      %s16 = sshll.u32 [#allocation2], 4
      %s17 = int_to_ptr.vmem [resolvable:$true] %s16
      %19 = dma.hbm_to_vmem [thread:$0]  %s0, 128, %s17, [#allocation3]
    $region5: #{tpu_custom_call.1} parent=1 // pred_fallthru
      _
    // Predicated region
    $region6: #{tpu_custom_call.1} parent=1 // pred_check
      _
    $region7: #{tpu_custom_call.1} parent=1 // pred_check_branch
      %21 = sbr.rel (0) target = $region9
    $region8: #{tpu_custom_call.1} parent=1 // pred_region
      %s23 = ssub.s32 4992, 4992
      %24 = vsyncadd [#allocation6], %s23
      %s25 = sshll.u32 [#allocation5], 4
      %s26 = int_to_ptr.vmem [resolvable:$true] %s25
      %31 = dma.hbm_to_vmem [thread:$0]  %s1, 4992, %s26, [#allocation6], 128, 128, 8
    $region9: #{tpu_custom_call.1} parent=1 // pred_fallthru
      _
    // Predicated region
    $region10: #{tpu_custom_call.1} parent=1 // pred_check
      _
    $region11: #{tpu_custom_call.1} parent=1 // pred_check_branch
      %33 = sbr.rel (0) target = $region13
    $region12: #{tpu_custom_call.1} parent=1 // pred_region
      %34 = dma.done [#allocation3], 128
    $region13: #{tpu_custom_call.1} parent=1 // pred_fallthru
      _
    // Predicated region
    $region14: #{tpu_custom_call.1} parent=1 // pred_check
      _
    $region15: #{tpu_custom_call.1} parent=1 // pred_check_branch
      %36 = sbr.rel (0) target = $region17
    $region16: #{tpu_custom_call.1} parent=1 // pred_region
      %37 = dma.done [#allocation6], 4992
    $region17: #{tpu_custom_call.1} parent=1 // pred_fallthru
      _
    %v38 = vld [vmem:[#allocation2] sm:$0xff]
    %v39 = vld [vmem:[#allocation5] sm:$0xff]
    %v40 = vld [vmem:[#allocation5 + $0x8] sm:$0xff]
    %v41 = vld [vmem:[#allocation5 + $0x10] sm:$0xff]
    %v42 = vld [vmem:[#allocation5 + $0x18] sm:$0xff]
    %v43 = vld [vmem:[#allocation5 + $0x20] sm:$0xff]
    %v44 = vld [vmem:[#allocation5 + $0x28] sm:$0xff]
    %v45 = vld [vmem:[#allocation5 + $0x30] sm:$0xff]
    %v46 = vld [vmem:[#allocation5 + $0x38] sm:$0xff]
    %v47 = vld [vmem:[#allocation5 + $0x40] sm:$0xff]
    %v48 = vld [vmem:[#allocation5 + $0x48] sm:$0xff]
    %v49 = vld [vmem:[#allocation5 + $0x50] sm:$0xff]
    %v50 = vld [vmem:[#allocation5 + $0x58] sm:$0xff]
    %v51 = vld [vmem:[#allocation5 + $0x60] sm:$0xff]
    %v52 = vld [vmem:[#allocation5 + $0x68] sm:$0xff]
    %v53 = vld [vmem:[#allocation5 + $0x70] sm:$0xff]
    %v54 = vld [vmem:[#allocation5 + $0x78] sm:$0xff]
    %v55 = vld [vmem:[#allocation5 + $0x80] sm:$0xff]
    %v56 = vld [vmem:[#allocation5 + $0x88] sm:$0xff]
    %v57 = vld [vmem:[#allocation5 + $0x90] sm:$0xff]
    %v58 = vld [vmem:[#allocation5 + $0x98] sm:$0xff]
    %v59 = vld [vmem:[#allocation5 + $0xa0] sm:$0xff]
    %v60 = vld [vmem:[#allocation5 + $0xa8] sm:$0xff]
    %v61 = vld [vmem:[#allocation5 + $0xb0] sm:$0xff]
    %v62 = vld [vmem:[#allocation5 + $0xb8] sm:$0xff]
    %v63 = vld [vmem:[#allocation5 + $0xc0] sm:$0xff]
    %v64 = vld [vmem:[#allocation5 + $0xc8] sm:$0xff]
    %v65 = vld [vmem:[#allocation5 + $0xd0] sm:$0xff]
    %v66 = vld [vmem:[#allocation5 + $0xd8] sm:$0xff]
    %v67 = vld [vmem:[#allocation5 + $0xe0] sm:$0xff]
    %v68 = vld [vmem:[#allocation5 + $0xe8] sm:$0xff]
    %v69 = vld [vmem:[#allocation5 + $0xf0] sm:$0xff]
    %v70 = vld [vmem:[#allocation5 + $0xf8] sm:$0xff]
    %v71 = vld [vmem:[#allocation5 + $0x100] sm:$0xff]
    %v72 = vld [vmem:[#allocation5 + $0x108] sm:$0xff]
    %v73 = vld [vmem:[#allocation5 + $0x110] sm:$0xff]
    %v74 = vld [vmem:[#allocation5 + $0x118] sm:$0xff]
    %v75 = vld [vmem:[#allocation5 + $0x120] sm:$0x1]
    %v76 = vld [vmem:[#allocation5 + $0x128] sm:$0x1]
    %v77 = vld [vmem:[#allocation5 + $0x130] sm:$0x1]
    %v78 = vlaneseq
    %v79 = vshrl.u32 %v78, 7
    %v80 = vsub.s32 0, %v79
    %v81 = vrot.slane %v75, %v80
    %vm82 = vcmask 130048
    %v84 = vsel %vm82, %v38, 0
    %86 = vmatprep.subr.mxu0 0.0
    %87 = vmatpush1.msra.mxu0 %v39
    %88 = vmatprep.subr.mxu0 0.0
    %89 = vmatpush1.msra.mxu0 %v40
    %90 = vmatprep.subr.mxu0 0.0
    %91 = vmatpush1.msra.mxu0 0.0
    %92 = vmatprep.subr.mxu0 0.0
    %93 = vmatpush1.msra.mxu0 0.0
    %94 = vmatprep.subr.mxu0 0.0
    %95 = vmatpush1.msra.mxu0 0.0
    %96 = vmatprep.subr.mxu0 0.0
    %97 = vmatpush1.msra.mxu0 0.0
    %98 = vmatprep.subr.mxu0 0.0
    %99 = vmatpush1.msra.mxu0 0.0
    %100 = vmatprep.subr.mxu0 0.0
    %101 = vmatpush1.msra.mxu0 0.0
    %102 = vmatprep.subr.mxu0 0.0
    %103 = vmatpush1.msra.mxu0 0.0
    %104 = vmatprep.subr.mxu0 0.0
    %105 = vmatpush1.msra.mxu0 0.0
    %106 = vmatprep.subr.mxu0 0.0
    %107 = vmatpush1.msra.mxu0 0.0
    %108 = vmatprep.subr.mxu0 0.0
    %109 = vmatpush1.msra.mxu0 0.0
    %110 = vmatprep.subr.mxu0 0.0
    %111 = vmatpush1.msra.mxu0 0.0
    %112 = vmatprep.subr.mxu0 0.0
    %113 = vmatpush1.msra.mxu0 0.0
    %114 = vmatprep.subr.mxu0 0.0
    %115 = vmatpush1.msra.mxu0 0.0
    %116 = vmatprep.subr.mxu0 0.0
    %117 = vmatpush1.msra.mxu0 0.0
    %118 = vmatprep.subr.mxu0 0.0
    %119 = vmatpush1.msra.mxu0 0.0
    %120 = vmatprep.subr.mxu0 0.0
    %121 = vmatpush1.msra.mxu0 0.0
    %122 = vmatprep.subr.mxu0 0.0
    %123 = vmatpush1.msra.mxu0 0.0
    %124 = vmatprep.subr.mxu0 0.0
    %125 = vmatpush1.msra.mxu0 0.0
    %126 = vmatprep.subr.mxu0 0.0
    %127 = vmatpush1.msra.mxu0 0.0
    %128 = vmatprep.subr.mxu0 0.0
    %129 = vmatpush1.msra.mxu0 0.0
    %130 = vmatprep.subr.mxu0 0.0
    %131 = vmatpush1.msra.mxu0 0.0
    %132 = vmatprep.subr.mxu0 0.0
    %133 = vmatpush1.msra.mxu0 0.0
    %134 = vmatprep.subr.mxu0 0.0
    %135 = vmatpush1.msra.mxu0 0.0
    %136 = vmatprep.subr.mxu0 0.0
    %137 = vmatpush1.msra.mxu0 0.0
    %138 = vmatprep.subr.mxu0 0.0
    %139 = vmatpush1.msra.mxu0 0.0
    %140 = vmatprep.subr.mxu0 0.0
    %141 = vmatpush1.msra.mxu0 0.0
    %142 = vmatprep.subr.mxu0 0.0
    %143 = vmatpush1.msra.mxu0 0.0
    %144 = vmatprep.subr.mxu0 0.0
    %145 = vmatpush1.msra.mxu0 0.0
    %146 = vmatprep.subr.mxu0 0.0
    %147 = vmatpush1.msra.mxu0 0.0
    %148 = vmatprep.subr.mxu0 0.0
    %149 = vmatpush1.msra.mxu0 0.0
    %150 = vmatprep.mubr.f32.mxu0 0.0
    %151 = vmatmul.mubr.f32.gmra.mrb[0].mxu0 %v84
    %v152 = vpop.f32.mrb[0].mxu0
    %v153 = vadd.f32 %v81, %v152
    %v154 = vpop.f32.mrb[0].mxu0
    %155 = vdwg.mxu0
    %v156 = vmul.f32 %v153, 0.01
    %v157 = vmax.f32 %v153, %v156
    %v158 = vlaneseq
    %v159 = vshrl.u32 %v158, 7
    %v160 = vsub.s32 0, %v159
    %v161 = vrot.slane %v76, %v160
    %162 = vmatprep.subr.mxu0 0.0
    %163 = vmatpush1.msra.mxu0 %v41
    %164 = vmatprep.subr.mxu0 0.0
    %165 = vmatpush1.msra.mxu0 %v42
    %166 = vmatprep.subr.mxu0 0.0
    %167 = vmatpush1.msra.mxu0 %v43
    %168 = vmatprep.subr.mxu0 0.0
    %169 = vmatpush1.msra.mxu0 %v44
    %170 = vmatprep.subr.mxu0 0.0
    %171 = vmatpush1.msra.mxu0 %v45
    %172 = vmatprep.subr.mxu0 0.0
    %173 = vmatpush1.msra.mxu0 %v46
    %174 = vmatprep.subr.mxu0 0.0
    %175 = vmatpush1.msra.mxu0 %v47
    %176 = vmatprep.subr.mxu0 0.0
    %177 = vmatpush1.msra.mxu0 %v48
    %178 = vmatprep.subr.mxu0 0.0
    %179 = vmatpush1.msra.mxu0 %v49
    %180 = vmatprep.subr.mxu0 0.0
    %181 = vmatpush1.msra.mxu0 %v50
    %182 = vmatprep.subr.mxu0 0.0
    %183 = vmatpush1.msra.mxu0 %v51
    %184 = vmatprep.subr.mxu0 0.0
    %185 = vmatpush1.msra.mxu0 %v52
    %186 = vmatprep.subr.mxu0 0.0
    %187 = vmatpush1.msra.mxu0 %v53
    %188 = vmatprep.subr.mxu0 0.0
    %189 = vmatpush1.msra.mxu0 %v54
    %190 = vmatprep.subr.mxu0 0.0
    %191 = vmatpush1.msra.mxu0 %v55
    %192 = vmatprep.subr.mxu0 0.0
    %193 = vmatpush1.msra.mxu0 %v56
    %194 = vmatprep.subr.mxu0 0.0
    %195 = vmatpush1.msra.mxu0 0.0
    %196 = vmatprep.subr.mxu0 0.0
    %197 = vmatpush1.msra.mxu0 0.0
    %198 = vmatprep.subr.mxu0 0.0
    %199 = vmatpush1.msra.mxu0 0.0
    %200 = vmatprep.subr.mxu0 0.0
    %201 = vmatpush1.msra.mxu0 0.0
    %202 = vmatprep.subr.mxu0 0.0
    %203 = vmatpush1.msra.mxu0 0.0
    %204 = vmatprep.subr.mxu0 0.0
    %205 = vmatpush1.msra.mxu0 0.0
    %206 = vmatprep.subr.mxu0 0.0
    %207 = vmatpush1.msra.mxu0 0.0
    %208 = vmatprep.subr.mxu0 0.0
    %209 = vmatpush1.msra.mxu0 0.0
    %210 = vmatprep.subr.mxu0 0.0
    %211 = vmatpush1.msra.mxu0 0.0
    %212 = vmatprep.subr.mxu0 0.0
    %213 = vmatpush1.msra.mxu0 0.0
    %214 = vmatprep.subr.mxu0 0.0
    %215 = vmatpush1.msra.mxu0 0.0
    %216 = vmatprep.subr.mxu0 0.0
    %217 = vmatpush1.msra.mxu0 0.0
    %218 = vmatprep.subr.mxu0 0.0
    %219 = vmatpush1.msra.mxu0 0.0
    %220 = vmatprep.subr.mxu0 0.0
    %221 = vmatpush1.msra.mxu0 0.0
    %222 = vmatprep.subr.mxu0 0.0
    %223 = vmatpush1.msra.mxu0 0.0
    %224 = vmatprep.subr.mxu0 0.0
    %225 = vmatpush1.msra.mxu0 0.0
    %226 = vmatprep.mubr.f32.mxu0 0.0
    %227 = vmatmul.mubr.f32.gmra.mrb[0].mxu0 %v157
    %v228 = vpop.f32.mrb[0].mxu0
    %v229 = vadd.f32 %v161, %v228
    %v230 = vpop.f32.mrb[0].mxu0
    %231 = vdwg.mxu0
    %v232 = vmul.f32 %v229, 0.01
    %v233 = vmax.f32 %v229, %v232
    %234 = vmatprep.subr.mxu0 0.0
    %235 = vmatpush1.msra.mxu0 %v73
    %236 = vmatprep.subr.mxu0 0.0
    %237 = vmatpush1.msra.mxu0 %v74
    %238 = vmatprep.subr.mxu0 0.0
    %239 = vmatpush1.msra.mxu0 0.0
    %240 = vmatprep.subr.mxu0 0.0
    %241 = vmatpush1.msra.mxu0 0.0
    %242 = vmatprep.subr.mxu0 0.0
    %243 = vmatpush1.msra.mxu0 0.0
    %244 = vmatprep.subr.mxu0 0.0
    %245 = vmatpush1.msra.mxu0 0.0
    %246 = vmatprep.subr.mxu0 0.0
    %247 = vmatpush1.msra.mxu0 0.0
    %248 = vmatprep.subr.mxu0 0.0
    %249 = vmatpush1.msra.mxu0 0.0
    %250 = vmatprep.subr.mxu0 0.0
    %251 = vmatpush1.msra.mxu0 0.0
    %252 = vmatprep.subr.mxu0 0.0
    %253 = vmatpush1.msra.mxu0 0.0
    %254 = vmatprep.subr.mxu0 0.0
    %255 = vmatpush1.msra.mxu0 0.0
    %256 = vmatprep.subr.mxu0 0.0
    %257 = vmatpush1.msra.mxu0 0.0
    %258 = vmatprep.subr.mxu0 0.0
    %259 = vmatpush1.msra.mxu0 0.0
    %260 = vmatprep.subr.mxu0 0.0
    %261 = vmatpush1.msra.mxu0 0.0
    %262 = vmatprep.subr.mxu0 0.0
    %263 = vmatpush1.msra.mxu0 0.0
    %264 = vmatprep.subr.mxu0 0.0
    %265 = vmatpush1.msra.mxu0 0.0
    %266 = vmatprep.subr.mxu0 0.0
    %267 = vmatpush1.msra.mxu0 0.0
    %268 = vmatprep.subr.mxu0 0.0
    %269 = vmatpush1.msra.mxu0 0.0
    %270 = vmatprep.subr.mxu0 0.0
    %271 = vmatpush1.msra.mxu0 0.0
    %272 = vmatprep.subr.mxu0 0.0
    %273 = vmatpush1.msra.mxu0 0.0
    %274 = vmatprep.subr.mxu0 0.0
    %275 = vmatpush1.msra.mxu0 0.0
    %276 = vmatprep.subr.mxu0 0.0
    %277 = vmatpush1.msra.mxu0 0.0
    %278 = vmatprep.subr.mxu0 0.0
    %279 = vmatpush1.msra.mxu0 0.0
    %280 = vmatprep.subr.mxu0 0.0
    %281 = vmatpush1.msra.mxu0 0.0
    %282 = vmatprep.subr.mxu0 0.0
    %283 = vmatpush1.msra.mxu0 0.0
    %284 = vmatprep.subr.mxu0 0.0
    %285 = vmatpush1.msra.mxu0 0.0
    %286 = vmatprep.subr.mxu0 0.0
    %287 = vmatpush1.msra.mxu0 0.0
    %288 = vmatprep.subr.mxu0 0.0
    %289 = vmatpush1.msra.mxu0 0.0
    %290 = vmatprep.subr.mxu0 0.0
    %291 = vmatpush1.msra.mxu0 0.0
    %292 = vmatprep.subr.mxu0 0.0
    %293 = vmatpush1.msra.mxu0 0.0
    %294 = vmatprep.subr.mxu0 0.0
    %295 = vmatpush1.msra.mxu0 0.0
    %296 = vmatprep.subr.mxu0 0.0
    %297 = vmatpush1.msra.mxu0 0.0
    %298 = vmatprep.mubr.f32.mxu0 0.0
    %299 = vmatmul.mubr.f32.gmra.mrb[0].mxu0 %v84
    %v300 = vpop.f32.mrb[0].mxu0
    %v301 = vadd.f32 0.0, %v300
    %v302 = vpop.f32.mrb[0].mxu0
    %303 = vdwg.mxu0
    %304 = vmatprep.subr.mxu0 0.0
    %305 = vmatpush1.msra.mxu0 %v57
    %306 = vmatprep.subr.mxu0 0.0
    %307 = vmatpush1.msra.mxu0 %v58
    %308 = vmatprep.subr.mxu0 0.0
    %309 = vmatpush1.msra.mxu0 %v59
    %310 = vmatprep.subr.mxu0 0.0
    %311 = vmatpush1.msra.mxu0 %v60
    %312 = vmatprep.subr.mxu0 0.0
    %313 = vmatpush1.msra.mxu0 %v61
    %314 = vmatprep.subr.mxu0 0.0
    %315 = vmatpush1.msra.mxu0 %v62
    %316 = vmatprep.subr.mxu0 0.0
    %317 = vmatpush1.msra.mxu0 %v63
    %318 = vmatprep.subr.mxu0 0.0
    %319 = vmatpush1.msra.mxu0 %v64
    %320 = vmatprep.subr.mxu0 0.0
    %321 = vmatpush1.msra.mxu0 %v65
    %322 = vmatprep.subr.mxu0 0.0
    %323 = vmatpush1.msra.mxu0 %v66
    %324 = vmatprep.subr.mxu0 0.0
    %325 = vmatpush1.msra.mxu0 %v67
    %326 = vmatprep.subr.mxu0 0.0
    %327 = vmatpush1.msra.mxu0 %v68
    %328 = vmatprep.subr.mxu0 0.0
    %329 = vmatpush1.msra.mxu0 %v69
    %330 = vmatprep.subr.mxu0 0.0
    %331 = vmatpush1.msra.mxu0 %v70
    %332 = vmatprep.subr.mxu0 0.0
    %333 = vmatpush1.msra.mxu0 %v71
    %334 = vmatprep.subr.mxu0 0.0
    %335 = vmatpush1.msra.mxu0 %v72
    %336 = vmatprep.subr.mxu0 0.0
    %337 = vmatpush1.msra.mxu0 0.0
    %338 = vmatprep.subr.mxu0 0.0
    %339 = vmatpush1.msra.mxu0 0.0
    %340 = vmatprep.subr.mxu0 0.0
    %341 = vmatpush1.msra.mxu0 0.0
    %342 = vmatprep.subr.mxu0 0.0
    %343 = vmatpush1.msra.mxu0 0.0
    %344 = vmatprep.subr.mxu0 0.0
    %345 = vmatpush1.msra.mxu0 0.0
    %346 = vmatprep.subr.mxu0 0.0
    %347 = vmatpush1.msra.mxu0 0.0
    %348 = vmatprep.subr.mxu0 0.0
    %349 = vmatpush1.msra.mxu0 0.0
    %350 = vmatprep.subr.mxu0 0.0
    %351 = vmatpush1.msra.mxu0 0.0
    %352 = vmatprep.subr.mxu0 0.0
    %353 = vmatpush1.msra.mxu0 0.0
    %354 = vmatprep.subr.mxu0 0.0
    %355 = vmatpush1.msra.mxu0 0.0
    %356 = vmatprep.subr.mxu0 0.0
    %357 = vmatpush1.msra.mxu0 0.0
    %358 = vmatprep.subr.mxu0 0.0
    %359 = vmatpush1.msra.mxu0 0.0
    %360 = vmatprep.subr.mxu0 0.0
    %361 = vmatpush1.msra.mxu0 0.0
    %362 = vmatprep.subr.mxu0 0.0
    %363 = vmatpush1.msra.mxu0 0.0
    %364 = vmatprep.subr.mxu0 0.0
    %365 = vmatpush1.msra.mxu0 0.0
    %366 = vmatprep.subr.mxu0 0.0
    %367 = vmatpush1.msra.mxu0 0.0
    %368 = vmatprep.mubr.f32.mxu0 0.0
    %369 = vmatmul.mubr.f32.gmra.mrb[0].mxu0 %v233
    %v370 = vpop.f32.mrb[0].mxu0
    %v371 = vadd.f32 %v301, %v370
    %v372 = vpop.f32.mrb[0].mxu0
    %373 = vdwg.mxu0
    %v374 = vlaneseq
    %v375 = vshrl.u32 %v374, 7
    %v376 = vsub.s32 0, %v375
    %v377 = vrot.slane %v77, %v376
    %v378 = vadd.f32 %v371, %v377
    %379 = vst [vmem:[#allocation7] sm:$0xff] %v378
    // Predicated region
    $region18: #{tpu_custom_call.1} parent=1 // pred_check
      _
    $region19: #{tpu_custom_call.1} parent=1 // pred_check_branch
      %381 = sbr.rel (0) target = $region21
    $region20: #{tpu_custom_call.1} parent=1 // pred_region
      %s383 = ssub.s32 128, 128
      %384 = vsyncadd [#allocation4], %s383
      %s386 = sshll.u32 [#allocation7], 4
      %s387 = int_to_ptr.vmem [resolvable:$true] %s386
      %389 = dma.vmem_to_hbm [thread:$0]  %s387, 128, %s2, [#allocation4]
    $region21: #{tpu_custom_call.1} parent=1 // pred_fallthru
      _
    // Predicated region
    $region22: #{tpu_custom_call.1} parent=1 // pred_check
      _
    $region23: #{tpu_custom_call.1} parent=1 // pred_check_branch
      %391 = sbr.rel (0) target = $region25
    $region24: #{tpu_custom_call.1} parent=1 // pred_region
      %392 = dma.done [#allocation4], 128
    $region25: #{tpu_custom_call.1} parent=1 // pred_fallthru
      _
    %393 = vsyncpa [#allocation3], 1
    %394 = vsyncpa [#allocation6], 1
    %395 = vsyncpa [#allocation4], 1

</llo_original>
